<compile_context>
chip_gen: v6e
topology: v6e:2x2x1
jax: 0.10.0
libtpu: 0.0.40
codegen_flags: <defaults>
</compile_context>

<pallas_src>
import numpy as np
import jax
import jax.numpy as jnp
from jax.experimental import pallas as pl
from jax.experimental.pallas import tpu as pltpu


def _round_up(x, m):
    return ((x + m - 1) // m) * m


def ae_layer_setup(n_features, sequence_length, hidden_size):
    """Replicates the layer-size derivation in AEModule.__init__."""
    input_length = n_features * sequence_length
    dec_steps = 2 ** np.arange(
        max(np.ceil(np.log2(hidden_size)), 2), np.log2(input_length)
    )[1:]
    dec_setup = np.concatenate([[hidden_size], dec_steps.repeat(2), [input_length]])
    enc_setup = dec_setup[::-1]
    enc_pairs = [(int(a), int(b)) for a, b in enc_setup.reshape(-1, 2)]
    dec_pairs = [(int(a), int(b)) for a, b in dec_setup.reshape(-1, 2)]
    return enc_pairs, dec_pairs


def init_params(enc_pairs, dec_pairs, key):
    """Deterministic init mimicking torch.nn.Linear default (uniform +-1/sqrt(fan_in)).
    Weights are stored pre-transposed as (in, out); biases as (1, out)."""
    params = []
    for (fan_in, fan_out) in enc_pairs + dec_pairs:
        key, kw, kb = jax.random.split(key, 3)
        bound = 1.0 / np.sqrt(fan_in)
        w_t = jax.random.uniform(kw, (fan_in, fan_out), jnp.float32, -bound, bound)
        b = jax.random.uniform(kb, (1, fan_out), jnp.float32, -bound, bound)
        params.append((w_t, b))
    return params


def make_ae_kernel(n_enc, n_dec, matmul_dtype):
    n_layers = n_enc + n_dec

    def kernel(*refs):
        # refs = [x_tile] + [w0, b0, w1, b1, ...] + [recon_tile, enc_tile]
        x_ref = refs[0]
        param_refs = refs[1:1 + 2 * n_layers]
        recon_ref, enc_ref = refs[1 + 2 * n_layers:]

        h = x_ref[...]  # (tm, D0_pad) f32, lane-padded with zeros
        for i in range(n_layers):
            w = param_refs[2 * i][...]        # (Din_pad, Dout_pad), bf16 operands
            b = param_refs[2 * i + 1][...]    # (1, Dout_pad), f32
            # MXU matmul in bf16 with f32 accumulation; bias add stays f32.
            h = jnp.dot(h.astype(matmul_dtype), w.astype(matmul_dtype),
                        preferred_element_type=jnp.float32) + b
            is_last_enc = i == n_enc - 1
            is_last_dec = i == n_layers - 1
            if not (is_last_enc or is_last_dec):
                h = jnp.tanh(h)               # f32 tanh on EUP (v5e-safe)
            if is_last_enc:
                enc_ref[...] = h              # lane-dense (padded to 128) store
        recon_ref[...] = h                    # lane-dense (padded to 128) store

    return kernel


def ae_forward(x, params, n_enc, n_dec, *, return_latent=False,
               tm=None, matmul_dtype=jnp.bfloat16):
    """Pallas implementation of AEModule.forward."""
    B = x.shape[0]
    x_flat = x.reshape(B, -1).astype(jnp.float32)      # x.view(B, -1).float()
    input_length = x_flat.shape[1]
    n_layers = n_enc + n_dec
    assert len(params) == n_layers

    # Layer widths (unpadded) and lane-padded widths (multiples of 128 lanes).
    widths = [input_length] + [int(w.shape[1]) for (w, _) in params]
    hidden_size = widths[n_enc]
    pw = [_round_up(d, 128) for d in widths]

    # Batch tile: fill MXU rows for real batches (256); small batches use a
    # minimal multiple-of-8 tile to avoid pointless padded work.
    if tm is None:
        tm = min(256, _round_up(max(B, 8), 8))
    B_pad = _round_up(B, tm)
    grid = (B_pad // tm,)

    # Batch/lane zero-padded input (zeros propagate harmlessly: tanh(0)=0 and
    # zero-padded weight rows/cols contribute nothing).
    x_pad = jnp.pad(x_flat, ((0, B_pad - B), (0, pw[0] - input_length)))

    # Zero-padded parameters; weights in bf16, biases in f32.
    flat_params = []
    for (w, b), din_p, dout_p in zip(params, pw[:-1], pw[1:]):
        w_p = jnp.pad(w.astype(matmul_dtype),
                      ((0, din_p - w.shape[0]), (0, dout_p - w.shape[1])))
        b_p = jnp.pad(b.astype(jnp.float32), ((0, 0), (0, dout_p - b.shape[1])))
        flat_params.extend([w_p, b_p])

    # BlockSpecs: batch-tiled x / outputs, resident (constant index) params.
    in_specs = [pl.BlockSpec((tm, pw[0]), lambda i: (i, 0))]
    for din_p, dout_p in zip(pw[:-1], pw[1:]):
        in_specs.append(pl.BlockSpec((din_p, dout_p), lambda i: (0, 0)))
        in_specs.append(pl.BlockSpec((1, dout_p), lambda i: (0, 0)))

    out_specs = (
        pl.BlockSpec((tm, pw[-1]), lambda i: (i, 0)),
        pl.BlockSpec((tm, pw[n_enc]), lambda i: (i, 0)),
    )
    out_shape = (
        jax.ShapeDtypeStruct((B_pad, pw[-1]), jnp.float32),
        jax.ShapeDtypeStruct((B_pad, pw[n_enc]), jnp.float32),
    )

    # VMEM budget: double-buffered x/recon/enc tiles + resident params + slack,
    # capped at 64 MiB so the same sizing is valid on v7x's smaller VMEM.
    param_bytes = sum(int(np.prod(p.shape)) * p.dtype.itemsize for p in flat_params)
    io_tile_bytes = tm * (pw[0] + pw[-1] + pw[n_enc]) * 4
    vmem_limit = int(min(64 * 1024 * 1024,
                         max(16 * 1024 * 1024,
                             4 * (2 * io_tile_bytes + param_bytes))))

    flops = 2 * B_pad * sum(a * b for a, b in zip(pw[:-1], pw[1:]))
    transcendentals = B_pad * sum(
        pw[i + 1] for i in range(n_layers) if i not in (n_enc - 1, n_layers - 1))
    bytes_accessed = B_pad * (pw[0] + pw[-1] + pw[n_enc]) * 4 + param_bytes

    recon_pad, enc_pad = pl.pallas_call(
        make_ae_kernel(n_enc, n_dec, matmul_dtype),
        grid=grid,
        in_specs=in_specs,
        out_specs=out_specs,
        out_shape=out_shape,
        compiler_params=pltpu.CompilerParams(
            dimension_semantics=("parallel",),   # shard batch tiles across TCs
            vmem_limit_bytes=vmem_limit,
        ),
        cost_estimate=pl.CostEstimate(
            flops=flops,
            transcendentals=transcendentals,
            bytes_accessed=bytes_accessed,
        ),
    )(x_pad, *flat_params)

    # Strip batch + lane padding in the wrapper.
    recon_x = recon_pad[:B, :input_length].reshape(x.shape)
    enc = enc_pad[:B, :hidden_size]
    return (recon_x, enc) if return_latent else recon_x


def ae_forward_ref(x, params, n_enc, n_dec, matmul_dtype=jnp.bfloat16):
    """Plain-JAX reference with the same bf16-matmul / f32-elementwise math."""
    h = x.reshape(x.shape[0], -1).astype(jnp.float32)
    n_layers = n_enc + n_dec
    enc = None
    for i, (w, b) in enumerate(params):
        h = jnp.dot(h.astype(matmul_dtype), w.astype(matmul_dtype),
                    preferred_element_type=jnp.float32) + b
        is_last_enc = i == n_enc - 1
        is_last_dec = i == n_layers - 1
        if not (is_last_enc or is_last_dec):
            h = jnp.tanh(h)
        if is_last_enc:
            enc = h
    return h.reshape(x.shape), enc


if __name__ == "__main__":
    # Small shapes consistent with the module.
    n_features = 4
    sequence_length = 8
    hidden_size = 4
    batch = 2

    enc_pairs, dec_pairs = ae_layer_setup(n_features, sequence_length, hidden_size)
    # For these sizes: encoder 32->16->8->4, decoder 4->8->16->32.
    n_enc, n_dec = len(enc_pairs), len(dec_pairs)

    key = jax.random.PRNGKey(0)
    key, kx, kp = jax.random.split(key, 3)
    x = jax.random.normal(kx, (batch, sequence_length, n_features), jnp.float32)
    params = init_params(enc_pairs, dec_pairs, kp)

    recon_x, enc = ae_forward(x, params, n_enc, n_dec, return_latent=True)
    recon_x = jax.block_until_ready(recon_x)
    enc = jax.block_until_ready(enc)

    assert recon_x.shape == x.shape, (recon_x.shape, x.shape)
    assert enc.shape == (batch, hidden_size), enc.shape

    ref_recon, ref_enc = ae_forward_ref(x, params, n_enc, n_dec)
    np.testing.assert_allclose(np.asarray(recon_x), np.asarray(ref_recon),
                               rtol=1e-4, atol=1e-4)
    np.testing.assert_allclose(np.asarray(enc), np.asarray(ref_enc),
                               rtol=1e-4, atol=1e-4)

    print("KERNEL_OK")
</pallas_src>

<mosaic_0001>
module attributes {stable_mosaic.version = 11 : i64} {
  func.func @kernel(%arg0: i32, %arg1: memref<8x128xf32, #tpu.memory_space<vmem>>, %arg2: memref<128x128xbf16, #tpu.memory_space<vmem>>, %arg3: memref<1x128xf32, #tpu.memory_space<vmem>>, %arg4: memref<128x128xbf16, #tpu.memory_space<vmem>>, %arg5: memref<1x128xf32, #tpu.memory_space<vmem>>, %arg6: memref<128x128xbf16, #tpu.memory_space<vmem>>, %arg7: memref<1x128xf32, #tpu.memory_space<vmem>>, %arg8: memref<128x128xbf16, #tpu.memory_space<vmem>>, %arg9: memref<1x128xf32, #tpu.memory_space<vmem>>, %arg10: memref<128x128xbf16, #tpu.memory_space<vmem>>, %arg11: memref<1x128xf32, #tpu.memory_space<vmem>>, %arg12: memref<128x128xbf16, #tpu.memory_space<vmem>>, %arg13: memref<1x128xf32, #tpu.memory_space<vmem>>, %arg14: memref<8x128xf32, #tpu.memory_space<vmem>>, %arg15: memref<8x128xf32, #tpu.memory_space<vmem>>) attributes {dimension_semantics = [#tpu.dimension_semantics<parallel>], iteration_bounds = array<i64: 1>, scalar_prefetch = 0 : i64, scratch_operands = 0 : i64, tpu.core_type = #tpu.core_type<tc>, window_params = [{transform_indices = @transform_0, window_bounds = array<i64: 8, 128>}, {pipeline_mode = #tpu.pipeline_mode<synchronous>, transform_indices = @transform_1, window_bounds = array<i64: 128, 128>}, {pipeline_mode = #tpu.pipeline_mode<synchronous>, transform_indices = @transform_2, window_bounds = array<i64: 1, 128>}, {pipeline_mode = #tpu.pipeline_mode<synchronous>, transform_indices = @transform_3, window_bounds = array<i64: 128, 128>}, {pipeline_mode = #tpu.pipeline_mode<synchronous>, transform_indices = @transform_4, window_bounds = array<i64: 1, 128>}, {pipeline_mode = #tpu.pipeline_mode<synchronous>, transform_indices = @transform_5, window_bounds = array<i64: 128, 128>}, {pipeline_mode = #tpu.pipeline_mode<synchronous>, transform_indices = @transform_6, window_bounds = array<i64: 1, 128>}, {pipeline_mode = #tpu.pipeline_mode<synchronous>, transform_indices = @transform_7, window_bounds = array<i64: 128, 128>}, {pipeline_mode = #tpu.pipeline_mode<synchronous>, transform_indices = @transform_8, window_bounds = array<i64: 1, 128>}, {pipeline_mode = #tpu.pipeline_mode<synchronous>, transform_indices = @transform_9, window_bounds = array<i64: 128, 128>}, {pipeline_mode = #tpu.pipeline_mode<synchronous>, transform_indices = @transform_10, window_bounds = array<i64: 1, 128>}, {pipeline_mode = #tpu.pipeline_mode<synchronous>, transform_indices = @transform_11, window_bounds = array<i64: 128, 128>}, {pipeline_mode = #tpu.pipeline_mode<synchronous>, transform_indices = @transform_12, window_bounds = array<i64: 1, 128>}, {transform_indices = @transform_13, window_bounds = array<i64: 8, 128>}, {transform_indices = @transform_14, window_bounds = array<i64: 8, 128>}]} {
    %c0 = arith.constant 0 : index
    %c0_0 = arith.constant 0 : index
    %0 = vector.load %arg1[%c0, %c0_0] : memref<8x128xf32, #tpu.memory_space<vmem>>, vector<8x128xf32>
    %c0_1 = arith.constant 0 : index
    %c0_2 = arith.constant 0 : index
    %1 = vector.load %arg2[%c0_1, %c0_2] : memref<128x128xbf16, #tpu.memory_space<vmem>>, vector<128x128xbf16>
    %c0_3 = arith.constant 0 : index
    %c0_4 = arith.constant 0 : index
    %2 = vector.load %arg3[%c0_3, %c0_4] : memref<1x128xf32, #tpu.memory_space<vmem>>, vector<1x128xf32>
    %3 = arith.truncf %0 : vector<8x128xf32> to vector<8x128xbf16>
    %cst = arith.constant dense<0.000000e+00> : vector<8x128xf32>
    %4 = tpu.matmul %3, %1, %cst {dimension_numbers = #tpu.dot_dimension_numbers<[1], [0], [0], [1], [0, 0, 1, 1], [], []>} : vector<8x128xbf16>, vector<128x128xbf16>, vector<8x128xf32> -> vector<8x128xf32>
    %5 = vector.broadcast %2 : vector<1x128xf32> to vector<8x128xf32>
    %6 = arith.addf %4, %5 : vector<8x128xf32>
    %7 = math.tanh %6 : vector<8x128xf32>
    %c0_5 = arith.constant 0 : index
    %c0_6 = arith.constant 0 : index
    %8 = vector.load %arg4[%c0_5, %c0_6] : memref<128x128xbf16, #tpu.memory_space<vmem>>, vector<128x128xbf16>
    %c0_7 = arith.constant 0 : index
    %c0_8 = arith.constant 0 : index
    %9 = vector.load %arg5[%c0_7, %c0_8] : memref<1x128xf32, #tpu.memory_space<vmem>>, vector<1x128xf32>
    %10 = arith.truncf %7 : vector<8x128xf32> to vector<8x128xbf16>
    %cst_9 = arith.constant dense<0.000000e+00> : vector<8x128xf32>
    %11 = tpu.matmul %10, %8, %cst_9 {dimension_numbers = #tpu.dot_dimension_numbers<[1], [0], [0], [1], [0, 0, 1, 1], [], []>} : vector<8x128xbf16>, vector<128x128xbf16>, vector<8x128xf32> -> vector<8x128xf32>
    %12 = vector.broadcast %9 : vector<1x128xf32> to vector<8x128xf32>
    %13 = arith.addf %11, %12 : vector<8x128xf32>
    %14 = math.tanh %13 : vector<8x128xf32>
    %c0_10 = arith.constant 0 : index
    %c0_11 = arith.constant 0 : index
    %15 = vector.load %arg6[%c0_10, %c0_11] : memref<128x128xbf16, #tpu.memory_space<vmem>>, vector<128x128xbf16>
    %c0_12 = arith.constant 0 : index
    %c0_13 = arith.constant 0 : index
    %16 = vector.load %arg7[%c0_12, %c0_13] : memref<1x128xf32, #tpu.memory_space<vmem>>, vector<1x128xf32>
    %17 = arith.truncf %14 : vector<8x128xf32> to vector<8x128xbf16>
    %cst_14 = arith.constant dense<0.000000e+00> : vector<8x128xf32>
    %18 = tpu.matmul %17, %15, %cst_14 {dimension_numbers = #tpu.dot_dimension_numbers<[1], [0], [0], [1], [0, 0, 1, 1], [], []>} : vector<8x128xbf16>, vector<128x128xbf16>, vector<8x128xf32> -> vector<8x128xf32>
    %19 = vector.broadcast %16 : vector<1x128xf32> to vector<8x128xf32>
    %20 = arith.addf %18, %19 : vector<8x128xf32>
    %c0_15 = arith.constant 0 : index
    %c0_16 = arith.constant 0 : index
    %21 = vector.load %arg15[%c0_15, %c0_16] : memref<8x128xf32, #tpu.memory_space<vmem>>, vector<8x128xf32>
    tpu.vector_store %arg15[%c0_15, %c0_16], %20 {strides = array<i32>} : memref<8x128xf32, #tpu.memory_space<vmem>>, vector<8x128xf32>,
    %c0_17 = arith.constant 0 : index
    %c0_18 = arith.constant 0 : index
    %22 = vector.load %arg8[%c0_17, %c0_18] : memref<128x128xbf16, #tpu.memory_space<vmem>>, vector<128x128xbf16>
    %c0_19 = arith.constant 0 : index
    %c0_20 = arith.constant 0 : index
    %23 = vector.load %arg9[%c0_19, %c0_20] : memref<1x128xf32, #tpu.memory_space<vmem>>, vector<1x128xf32>
    %24 = arith.truncf %20 : vector<8x128xf32> to vector<8x128xbf16>
    %cst_21 = arith.constant dense<0.000000e+00> : vector<8x128xf32>
    %25 = tpu.matmul %24, %22, %cst_21 {dimension_numbers = #tpu.dot_dimension_numbers<[1], [0], [0], [1], [0, 0, 1, 1], [], []>} : vector<8x128xbf16>, vector<128x128xbf16>, vector<8x128xf32> -> vector<8x128xf32>
    %26 = vector.broadcast %23 : vector<1x128xf32> to vector<8x128xf32>
    %27 = arith.addf %25, %26 : vector<8x128xf32>
    %28 = math.tanh %27 : vector<8x128xf32>
    %c0_22 = arith.constant 0 : index
    %c0_23 = arith.constant 0 : index
    %29 = vector.load %arg10[%c0_22, %c0_23] : memref<128x128xbf16, #tpu.memory_space<vmem>>, vector<128x128xbf16>
    %c0_24 = arith.constant 0 : index
    %c0_25 = arith.constant 0 : index
    %30 = vector.load %arg11[%c0_24, %c0_25] : memref<1x128xf32, #tpu.memory_space<vmem>>, vector<1x128xf32>
    %31 = arith.truncf %28 : vector<8x128xf32> to vector<8x128xbf16>
    %cst_26 = arith.constant dense<0.000000e+00> : vector<8x128xf32>
    %32 = tpu.matmul %31, %29, %cst_26 {dimension_numbers = #tpu.dot_dimension_numbers<[1], [0], [0], [1], [0, 0, 1, 1], [], []>} : vector<8x128xbf16>, vector<128x128xbf16>, vector<8x128xf32> -> vector<8x128xf32>
    %33 = vector.broadcast %30 : vector<1x128xf32> to vector<8x128xf32>
    %34 = arith.addf %32, %33 : vector<8x128xf32>
    %35 = math.tanh %34 : vector<8x128xf32>
    %c0_27 = arith.constant 0 : index
    %c0_28 = arith.constant 0 : index
    %36 = vector.load %arg12[%c0_27, %c0_28] : memref<128x128xbf16, #tpu.memory_space<vmem>>, vector<128x128xbf16>
    %c0_29 = arith.constant 0 : index
    %c0_30 = arith.constant 0 : index
    %37 = vector.load %arg13[%c0_29, %c0_30] : memref<1x128xf32, #tpu.memory_space<vmem>>, vector<1x128xf32>
    %38 = arith.truncf %35 : vector<8x128xf32> to vector<8x128xbf16>
    %cst_31 = arith.constant dense<0.000000e+00> : vector<8x128xf32>
    %39 = tpu.matmul %38, %36, %cst_31 {dimension_numbers = #tpu.dot_dimension_numbers<[1], [0], [0], [1], [0, 0, 1, 1], [], []>} : vector<8x128xbf16>, vector<128x128xbf16>, vector<8x128xf32> -> vector<8x128xf32>
    %40 = vector.broadcast %37 : vector<1x128xf32> to vector<8x128xf32>
    %41 = arith.addf %39, %40 : vector<8x128xf32>
    %c0_32 = arith.constant 0 : index
    %c0_33 = arith.constant 0 : index
    %42 = vector.load %arg14[%c0_32, %c0_33] : memref<8x128xf32, #tpu.memory_space<vmem>>, vector<8x128xf32>
    tpu.vector_store %arg14[%c0_32, %c0_33], %41 {strides = array<i32>} : memref<8x128xf32, #tpu.memory_space<vmem>>, vector<8x128xf32>,
    return
  }
  func.func @transform_0(%arg0: i32) -> (i32, i32) {
    %c0_i32 = arith.constant 0 : i32
    %c0_i32_0 = arith.constant 0 : i32
    return %arg0, %c0_i32 : i32, i32
  }
  func.func @transform_1(%arg0: i32) -> (i32, i32) {
    %c0_i32 = arith.constant 0 : i32
    %c0_i32_0 = arith.constant 0 : i32
    %c0_i32_1 = arith.constant 0 : i32
    return %c0_i32, %c0_i32_0 : i32, i32
  }
  func.func @transform_2(%arg0: i32) -> (i32, i32) {
    %c0_i32 = arith.constant 0 : i32
    %c0_i32_0 = arith.constant 0 : i32
    %c0_i32_1 = arith.constant 0 : i32
    return %c0_i32, %c0_i32_0 : i32, i32
  }
  func.func @transform_3(%arg0: i32) -> (i32, i32) {
    %c0_i32 = arith.constant 0 : i32
    %c0_i32_0 = arith.constant 0 : i32
    %c0_i32_1 = arith.constant 0 : i32
    return %c0_i32, %c0_i32_0 : i32, i32
  }
  func.func @transform_4(%arg0: i32) -> (i32, i32) {
    %c0_i32 = arith.constant 0 : i32
    %c0_i32_0 = arith.constant 0 : i32
    %c0_i32_1 = arith.constant 0 : i32
    return %c0_i32, %c0_i32_0 : i32, i32
  }
  func.func @transform_5(%arg0: i32) -> (i32, i32) {
    %c0_i32 = arith.constant 0 : i32
    %c0_i32_0 = arith.constant 0 : i32
    %c0_i32_1 = arith.constant 0 : i32
    return %c0_i32, %c0_i32_0 : i32, i32
  }
  func.func @transform_6(%arg0: i32) -> (i32, i32) {
    %c0_i32 = arith.constant 0 : i32
    %c0_i32_0 = arith.constant 0 : i32
    %c0_i32_1 = arith.constant 0 : i32
    return %c0_i32, %c0_i32_0 : i32, i32
  }
  func.func @transform_7(%arg0: i32) -> (i32, i32) {
    %c0_i32 = arith.constant 0 : i32
    %c0_i32_0 = arith.constant 0 : i32
    %c0_i32_1 = arith.constant 0 : i32
    return %c0_i32, %c0_i32_0 : i32, i32
  }
  func.func @transform_8(%arg0: i32) -> (i32, i32) {
    %c0_i32 = arith.constant 0 : i32
    %c0_i32_0 = arith.constant 0 : i32
    %c0_i32_1 = arith.constant 0 : i32
    return %c0_i32, %c0_i32_0 : i32, i32
  }
  func.func @transform_9(%arg0: i32) -> (i32, i32) {
    %c0_i32 = arith.constant 0 : i32
    %c0_i32_0 = arith.constant 0 : i32
    %c0_i32_1 = arith.constant 0 : i32
    return %c0_i32, %c0_i32_0 : i32, i32
  }
  func.func @transform_10(%arg0: i32) -> (i32, i32) {
    %c0_i32 = arith.constant 0 : i32
    %c0_i32_0 = arith.constant 0 : i32
    %c0_i32_1 = arith.constant 0 : i32
    return %c0_i32, %c0_i32_0 : i32, i32
  }
  func.func @transform_11(%arg0: i32) -> (i32, i32) {
    %c0_i32 = arith.constant 0 : i32
    %c0_i32_0 = arith.constant 0 : i32
    %c0_i32_1 = arith.constant 0 : i32
    return %c0_i32, %c0_i32_0 : i32, i32
  }
  func.func @transform_12(%arg0: i32) -> (i32, i32) {
    %c0_i32 = arith.constant 0 : i32
    %c0_i32_0 = arith.constant 0 : i32
    %c0_i32_1 = arith.constant 0 : i32
    return %c0_i32, %c0_i32_0 : i32, i32
  }
  func.func @transform_13(%arg0: i32) -> (i32, i32) {
    %c0_i32 = arith.constant 0 : i32
    %c0_i32_0 = arith.constant 0 : i32
    return %arg0, %c0_i32 : i32, i32
  }
  func.func @transform_14(%arg0: i32) -> (i32, i32) {
    %c0_i32 = arith.constant 0 : i32
    %c0_i32_0 = arith.constant 0 : i32
    return %arg0, %c0_i32 : i32, i32
  }
}

</mosaic_0001>

<llo_original>
// kernel: tpu_custom_call.1
$region0: #{tpu_custom_call.1}
  #allocation0 [shape = 'u32[]', space=smem, size = 0x4, offset = 0x4, fixed_abs, tag = 'smem constant byte address 0x4 - core index']
  #allocation1 [shape = 'u32[144,128]{1,0:T(1,128)}', space=vmem, size = 0x12000, scoped, tag = 'internal scratch']
  %s0 = inlined_call_operand.hbm [shape: f32[8,128], index: 0, kind: input, shape index: {}]
  %s1 = inlined_call_operand.hbm [shape: bf16[128,128], index: 1, kind: input, shape index: {}]
  %s2 = inlined_call_operand.vmem [shape: f32[1,128], index: 2, kind: input, shape index: {}]
  %s3 = inlined_call_operand.hbm [shape: bf16[128,128], index: 3, kind: input, shape index: {}]
  %s4 = inlined_call_operand.vmem [shape: f32[1,128], index: 4, kind: input, shape index: {}]
  %s5 = inlined_call_operand.hbm [shape: bf16[128,128], index: 5, kind: input, shape index: {}]
  %s6 = inlined_call_operand.vmem [shape: f32[1,128], index: 6, kind: input, shape index: {}]
  %s7 = inlined_call_operand.hbm [shape: bf16[128,128], index: 7, kind: input, shape index: {}]
  %s8 = inlined_call_operand.vmem [shape: f32[1,128], index: 8, kind: input, shape index: {}]
  %s9 = inlined_call_operand.hbm [shape: bf16[128,128], index: 9, kind: input, shape index: {}]
  %s10 = inlined_call_operand.vmem [shape: f32[1,128], index: 10, kind: input, shape index: {}]
  %s11 = inlined_call_operand.hbm [shape: bf16[128,128], index: 11, kind: input, shape index: {}]
  %s12 = inlined_call_operand.vmem [shape: f32[1,128], index: 12, kind: input, shape index: {}]
  %s13 = inlined_call_operand.hbm [shape: f32[8,128], index: 13, kind: output, shape index: {0}]
  %s14 = inlined_call_operand.hbm [shape: f32[8,128], index: 14, kind: output, shape index: {1}]
  %15 = xla_tuple %s13, %s14
  %s16 = sld [smem:[#allocation0]]
  $region98: #{tpu_custom_call.1} parent=0
    _
  %s18 = ssub.s32 1, %s16
  %s19 = scalar_select 0, %s18, %s16
  $region1: #{tpu_custom_call.1} parent=0
    #allocation2 [shape = 'u8[4096]{0}', space=vmem, size = 0x1000, scoped, tag = 'input window, operand 0, single buffered']
    #allocation3 [shape = 's32[1]{0}', space=sflag, size = 0x4, scoped, tag = 'scoped memory for tpu_custom_call.1']
    #allocation4 [shape = 's32[1]{0}', space=sflag, size = 0x4, scoped, tag = 'scoped memory for tpu_custom_call.1']
    #allocation5 [shape = 'u8[32768]{0}', space=vmem, size = 0x8000, scoped, tag = 'input window, operand 1, single buffered']
    #allocation6 [shape = 's32[1]{0}', space=sflag, size = 0x4, scoped, tag = 'scoped memory for tpu_custom_call.1']
    #allocation7 [shape = 'u8[32768]{0}', space=vmem, size = 0x8000, scoped, tag = 'input window, operand 3, single buffered']
    #allocation8 [shape = 'u8[32768]{0}', space=vmem, size = 0x8000, scoped, tag = 'input window, operand 5, single buffered']
    #allocation9 [shape = 's32[1]{0}', space=sflag, size = 0x4, scoped, tag = 'scoped memory for tpu_custom_call.1']
    #allocation10 [shape = 'u8[32768]{0}', space=vmem, size = 0x8000, scoped, tag = 'input window, operand 7, single buffered']
    #allocation11 [shape = 'u8[32768]{0}', space=vmem, size = 0x8000, scoped, tag = 'input window, operand 9, single buffered']
    #allocation12 [shape = 's32[1]{0}', space=sflag, size = 0x4, scoped, tag = 'scoped memory for tpu_custom_call.1']
    #allocation13 [shape = 'u8[32768]{0}', space=vmem, size = 0x8000, scoped, tag = 'input window, operand 11, single buffered']
    #allocation14 [shape = 'u8[4096]{0}', space=vmem, size = 0x1000, scoped, tag = 'output window, operand 0, single buffered']
    #allocation15 [shape = 'u8[4096]{0}', space=vmem, size = 0x1000, scoped, tag = 'output window, operand 1, single buffered']
    #allocation16 [shape = 's32[1]{0}', space=sflag, size = 0x4, scoped, tag = 'scoped memory for tpu_custom_call.1']
    %20 = vsyncpa [#allocation3], 0
    %21 = vsyncpa [#allocation6], 0
    %22 = vsyncpa [#allocation9], 0
    %23 = vsyncpa [#allocation12], 0
    %24 = vsyncpa [#allocation4], 0
    %25 = vsyncpa [#allocation16], 0
    // Predicated region
    $region2: #{tpu_custom_call.1} parent=1 // pred_check
      _
    $region3: #{tpu_custom_call.1} parent=1 // pred_check_branch
      %27 = sbr.rel (0) target = $region5
    $region4: #{tpu_custom_call.1} parent=1 // pred_region
      %s29 = ssub.s32 128, 128
      %30 = vsyncadd [#allocation3], %s29
      %s32 = sshll.u32 [#allocation2], 4
      %s33 = int_to_ptr.vmem [resolvable:$true] %s32
      %35 = dma.hbm_to_vmem [thread:$0]  %s0, 128, %s33, [#allocation3]
    $region5: #{tpu_custom_call.1} parent=1 // pred_fallthru
      _
    // Predicated region
    $region6: #{tpu_custom_call.1} parent=1 // pred_check
      _
    $region7: #{tpu_custom_call.1} parent=1 // pred_check_branch
      %37 = sbr.rel (0) target = $region9
    $region8: #{tpu_custom_call.1} parent=1 // pred_region
      %s39 = ssub.s32 1024, 1024
      %40 = vsyncadd [#allocation6], %s39
      %s41 = sshll.u32 [#allocation5], 4
      %s42 = int_to_ptr.vmem [resolvable:$true] %s41
      %47 = dma.hbm_to_vmem [thread:$0]  %s1, 1024, %s42, [#allocation6], 64, 64, 4
    $region9: #{tpu_custom_call.1} parent=1 // pred_fallthru
      _
    // Predicated region
    $region10: #{tpu_custom_call.1} parent=1 // pred_check
      _
    $region11: #{tpu_custom_call.1} parent=1 // pred_check_branch
      %49 = sbr.rel (0) target = $region13
    $region12: #{tpu_custom_call.1} parent=1 // pred_region
      _
    $region13: #{tpu_custom_call.1} parent=1 // pred_fallthru
      _
    // Predicated region
    $region14: #{tpu_custom_call.1} parent=1 // pred_check
      _
    $region15: #{tpu_custom_call.1} parent=1 // pred_check_branch
      %51 = sbr.rel (0) target = $region17
    $region16: #{tpu_custom_call.1} parent=1 // pred_region
      %s53 = ssub.s32 1024, 1024
      %54 = vsyncadd [#allocation6], %s53
      %s55 = sshll.u32 [#allocation7], 4
      %s56 = int_to_ptr.vmem [resolvable:$true] %s55
      %61 = dma.hbm_to_vmem [thread:$0]  %s3, 1024, %s56, [#allocation6], 64, 64, 4
    $region17: #{tpu_custom_call.1} parent=1 // pred_fallthru
      _
    // Predicated region
    $region18: #{tpu_custom_call.1} parent=1 // pred_check
      _
    $region19: #{tpu_custom_call.1} parent=1 // pred_check_branch
      %63 = sbr.rel (0) target = $region21
    $region20: #{tpu_custom_call.1} parent=1 // pred_region
      _
    $region21: #{tpu_custom_call.1} parent=1 // pred_fallthru
      _
    // Predicated region
    $region22: #{tpu_custom_call.1} parent=1 // pred_check
      _
    $region23: #{tpu_custom_call.1} parent=1 // pred_check_branch
      %65 = sbr.rel (0) target = $region25
    $region24: #{tpu_custom_call.1} parent=1 // pred_region
      %s67 = ssub.s32 1024, 1024
      %68 = vsyncadd [#allocation9], %s67
      %s69 = sshll.u32 [#allocation8], 4
      %s70 = int_to_ptr.vmem [resolvable:$true] %s69
      %75 = dma.hbm_to_vmem [thread:$0]  %s5, 1024, %s70, [#allocation9], 64, 64, 4
    $region25: #{tpu_custom_call.1} parent=1 // pred_fallthru
      _
    // Predicated region
    $region26: #{tpu_custom_call.1} parent=1 // pred_check
      _
    $region27: #{tpu_custom_call.1} parent=1 // pred_check_branch
      %77 = sbr.rel (0) target = $region29
    $region28: #{tpu_custom_call.1} parent=1 // pred_region
      _
    $region29: #{tpu_custom_call.1} parent=1 // pred_fallthru
      _
    // Predicated region
    $region30: #{tpu_custom_call.1} parent=1 // pred_check
      _
    $region31: #{tpu_custom_call.1} parent=1 // pred_check_branch
      %79 = sbr.rel (0) target = $region33
    $region32: #{tpu_custom_call.1} parent=1 // pred_region
      %s81 = ssub.s32 1024, 1024
      %82 = vsyncadd [#allocation9], %s81
      %s83 = sshll.u32 [#allocation10], 4
      %s84 = int_to_ptr.vmem [resolvable:$true] %s83
      %89 = dma.hbm_to_vmem [thread:$0]  %s7, 1024, %s84, [#allocation9], 64, 64, 4
    $region33: #{tpu_custom_call.1} parent=1 // pred_fallthru
      _
    // Predicated region
    $region34: #{tpu_custom_call.1} parent=1 // pred_check
      _
    $region35: #{tpu_custom_call.1} parent=1 // pred_check_branch
      %91 = sbr.rel (0) target = $region37
    $region36: #{tpu_custom_call.1} parent=1 // pred_region
      _
    $region37: #{tpu_custom_call.1} parent=1 // pred_fallthru
      _
    // Predicated region
    $region38: #{tpu_custom_call.1} parent=1 // pred_check
      _
    $region39: #{tpu_custom_call.1} parent=1 // pred_check_branch
      %93 = sbr.rel (0) target = $region41
    $region40: #{tpu_custom_call.1} parent=1 // pred_region
      %s95 = ssub.s32 1024, 1024
      %96 = vsyncadd [#allocation12], %s95
      %s97 = sshll.u32 [#allocation11], 4
      %s98 = int_to_ptr.vmem [resolvable:$true] %s97
      %103 = dma.hbm_to_vmem [thread:$0]  %s9, 1024, %s98, [#allocation12], 64, 64, 4
    $region41: #{tpu_custom_call.1} parent=1 // pred_fallthru
      _
    // Predicated region
    $region42: #{tpu_custom_call.1} parent=1 // pred_check
      _
    $region43: #{tpu_custom_call.1} parent=1 // pred_check_branch
      %105 = sbr.rel (0) target = $region45
    $region44: #{tpu_custom_call.1} parent=1 // pred_region
      _
    $region45: #{tpu_custom_call.1} parent=1 // pred_fallthru
      _
    // Predicated region
    $region46: #{tpu_custom_call.1} parent=1 // pred_check
      _
    $region47: #{tpu_custom_call.1} parent=1 // pred_check_branch
      %107 = sbr.rel (0) target = $region49
    $region48: #{tpu_custom_call.1} parent=1 // pred_region
      %s109 = ssub.s32 1024, 1024
      %110 = vsyncadd [#allocation12], %s109
      %s111 = sshll.u32 [#allocation13], 4
      %s112 = int_to_ptr.vmem [resolvable:$true] %s111
      %117 = dma.hbm_to_vmem [thread:$0]  %s11, 1024, %s112, [#allocation12], 64, 64, 4
    $region49: #{tpu_custom_call.1} parent=1 // pred_fallthru
      _
    // Predicated region
    $region50: #{tpu_custom_call.1} parent=1 // pred_check
      _
    $region51: #{tpu_custom_call.1} parent=1 // pred_check_branch
      %119 = sbr.rel (0) target = $region53
    $region52: #{tpu_custom_call.1} parent=1 // pred_region
      _
    $region53: #{tpu_custom_call.1} parent=1 // pred_fallthru
      _
    // Predicated region
    $region54: #{tpu_custom_call.1} parent=1 // pred_check
      _
    $region55: #{tpu_custom_call.1} parent=1 // pred_check_branch
      %121 = sbr.rel (0) target = $region57
    $region56: #{tpu_custom_call.1} parent=1 // pred_region
      %122 = dma.done [#allocation3], 128
    $region57: #{tpu_custom_call.1} parent=1 // pred_fallthru
      _
    // Predicated region
    $region58: #{tpu_custom_call.1} parent=1 // pred_check
      _
    $region59: #{tpu_custom_call.1} parent=1 // pred_check_branch
      %124 = sbr.rel (0) target = $region61
    $region60: #{tpu_custom_call.1} parent=1 // pred_region
      %125 = dma.done [#allocation6], 1024
    $region61: #{tpu_custom_call.1} parent=1 // pred_fallthru
      _
    // Predicated region
    $region62: #{tpu_custom_call.1} parent=1 // pred_check
      _
    $region63: #{tpu_custom_call.1} parent=1 // pred_check_branch
      %127 = sbr.rel (0) target = $region65
    $region64: #{tpu_custom_call.1} parent=1 // pred_region
      %128 = dma.done [#allocation6], 1024
    $region65: #{tpu_custom_call.1} parent=1 // pred_fallthru
      _
    // Predicated region
    $region66: #{tpu_custom_call.1} parent=1 // pred_check
      _
    $region67: #{tpu_custom_call.1} parent=1 // pred_check_branch
      %130 = sbr.rel (0) target = $region69
    $region68: #{tpu_custom_call.1} parent=1 // pred_region
      %131 = dma.done [#allocation9], 1024
    $region69: #{tpu_custom_call.1} parent=1 // pred_fallthru
      _
    // Predicated region
    $region70: #{tpu_custom_call.1} parent=1 // pred_check
      _
    $region71: #{tpu_custom_call.1} parent=1 // pred_check_branch
      %133 = sbr.rel (0) target = $region73
    $region72: #{tpu_custom_call.1} parent=1 // pred_region
      %134 = dma.done [#allocation9], 1024
    $region73: #{tpu_custom_call.1} parent=1 // pred_fallthru
      _
    // Predicated region
    $region74: #{tpu_custom_call.1} parent=1 // pred_check
      _
    $region75: #{tpu_custom_call.1} parent=1 // pred_check_branch
      %136 = sbr.rel (0) target = $region77
    $region76: #{tpu_custom_call.1} parent=1 // pred_region
      %137 = dma.done [#allocation12], 1024
    $region77: #{tpu_custom_call.1} parent=1 // pred_fallthru
      _
    // Predicated region
    $region78: #{tpu_custom_call.1} parent=1 // pred_check
      _
    $region79: #{tpu_custom_call.1} parent=1 // pred_check_branch
      %139 = sbr.rel (0) target = $region81
    $region80: #{tpu_custom_call.1} parent=1 // pred_region
      %140 = dma.done [#allocation12], 1024
    $region81: #{tpu_custom_call.1} parent=1 // pred_fallthru
      _
    %v142 = vld [vmem:[#allocation2] sm:$0xff]
    %v143 = vld [vmem:[#allocation5] sm:$0xf]
    %v144 = vld [vmem:[#allocation5 + $0x4] sm:$0xf]
    %v145 = vld [vmem:[#allocation5 + $0x8] sm:$0xf]
    %v146 = vld [vmem:[#allocation5 + $0xc] sm:$0xf]
    %v147 = vld [vmem:[#allocation5 + $0x10] sm:$0xf]
    %v148 = vld [vmem:[#allocation5 + $0x14] sm:$0xf]
    %v149 = vld [vmem:[#allocation5 + $0x18] sm:$0xf]
    %v150 = vld [vmem:[#allocation5 + $0x1c] sm:$0xf]
    %v151 = vld [vmem:[#allocation5 + $0x20] sm:$0xf]
    %v152 = vld [vmem:[#allocation5 + $0x24] sm:$0xf]
    %v153 = vld [vmem:[#allocation5 + $0x28] sm:$0xf]
    %v154 = vld [vmem:[#allocation5 + $0x2c] sm:$0xf]
    %v155 = vld [vmem:[#allocation5 + $0x30] sm:$0xf]
    %v156 = vld [vmem:[#allocation5 + $0x34] sm:$0xf]
    %v157 = vld [vmem:[#allocation5 + $0x38] sm:$0xf]
    %v158 = vld [vmem:[#allocation5 + $0x3c] sm:$0xf]
    %v159 = vld [vmem:[%s2] sm:$0x1]
    %v160 = vpack.c.bf16 %v142, %v142
    %v162 = vlaneseq
    %v163 = vshrl.u32 %v162, 7
    %v164 = vsub.s32 0, %v163
    %v165 = vrot.slane %v159, %v164
    %v183 = vunpack.c.l.b16 %v143
    %v184 = vunpack.c.l.b16 %v144
    %v185 = vunpack.c.l.b16 %v145
    %v186 = vunpack.c.l.b16 %v146
    %v187 = vunpack.c.l.b16 %v147
    %v188 = vunpack.c.l.b16 %v148
    %v189 = vunpack.c.l.b16 %v149
    %v190 = vunpack.c.l.b16 %v150
    %v191 = vunpack.c.l.b16 %v151
    %v192 = vunpack.c.l.b16 %v152
    %v193 = vunpack.c.l.b16 %v153
    %v194 = vunpack.c.l.b16 %v154
    %v195 = vunpack.c.l.b16 %v155
    %v196 = vunpack.c.l.b16 %v156
    %v197 = vunpack.c.l.b16 %v157
    %v198 = vunpack.c.l.b16 %v158
    %v199 = vpack.c.b16 %v184, %v183
    %v200 = vpack.c.b16 %v186, %v185
    %v201 = vpack.c.b16 %v188, %v187
    %v202 = vpack.c.b16 %v190, %v189
    %v203 = vpack.c.b16 %v192, %v191
    %v204 = vpack.c.b16 %v194, %v193
    %v205 = vpack.c.b16 %v196, %v195
    %v206 = vpack.c.b16 %v198, %v197
    %215 = vmatprep.subr.bf16.mxu0 0
    %216 = vmatpush1.bf16.msra.mxu0 %v206
    %217 = vmatprep.subr.bf16.mxu0 0
    %218 = vmatpush1.bf16.msra.mxu0 %v205
    %219 = vmatprep.subr.bf16.mxu0 0
    %220 = vmatpush1.bf16.msra.mxu0 %v204
    %221 = vmatprep.subr.bf16.mxu0 0
    %222 = vmatpush1.bf16.msra.mxu0 %v203
    %223 = vmatprep.subr.bf16.mxu0 0
    %224 = vmatpush1.bf16.msra.mxu0 %v202
    %225 = vmatprep.subr.bf16.mxu0 0
    %226 = vmatpush1.bf16.msra.mxu0 %v201
    %227 = vmatprep.subr.bf16.mxu0 0
    %228 = vmatpush1.bf16.msra.mxu0 %v200
    %229 = vmatprep.subr.bf16.mxu0 0
    %230 = vmatpush1.bf16.msra.mxu0 %v199
    %231 = vmatprep.subr.bf16.mxu0 0
    %232 = vmatpush2.bf16.msra.mxu0 0
    %233 = vmatprep.subr.bf16.mxu0 0
    %234 = vmatpush2.bf16.msra.mxu0 0
    %235 = vmatprep.subr.bf16.mxu0 0
    %236 = vmatpush2.bf16.msra.mxu0 0
    %237 = vmatprep.subr.bf16.mxu0 0
    %238 = vmatpush2.bf16.msra.mxu0 0
    %239 = vmatprep.subr.bf16.mxu0 0
    %240 = vmatpush2.bf16.msra.mxu0 0
    %241 = vmatprep.subr.bf16.mxu0 0
    %242 = vmatpush2.bf16.msra.mxu0 0
    %243 = vmatprep.subr.bf16.mxu0 0
    %244 = vmatpush2.bf16.msra.mxu0 0
    %245 = vmatprep.subr.bf16.mxu0 0
    %246 = vmatpush2.bf16.msra.mxu0 0
    %247 = vmatprep.mubr.bf16.mxu0 0
    %248 = vmatmul.mubr.bf16.gmra.mxu0 %v160
    %v249 = vpop.f32.mrf.mxu0
    %v250 = vadd.f32 %v165, %v249
    %v251 = vpop.f32.mrf.mxu0
    %v252 = vpop.f32.mrf.mxu0
    %v253 = vpop.f32.mrf.mxu0
    %254 = vdwg.mxu0
    %v255 = vtanh.pop %v250
    %v256 = vld [vmem:[#allocation7] sm:$0xf]
    %v257 = vld [vmem:[#allocation7 + $0x4] sm:$0xf]
    %v258 = vld [vmem:[#allocation7 + $0x8] sm:$0xf]
    %v259 = vld [vmem:[#allocation7 + $0xc] sm:$0xf]
    %v260 = vld [vmem:[#allocation7 + $0x10] sm:$0xf]
    %v261 = vld [vmem:[#allocation7 + $0x14] sm:$0xf]
    %v262 = vld [vmem:[#allocation7 + $0x18] sm:$0xf]
    %v263 = vld [vmem:[#allocation7 + $0x1c] sm:$0xf]
    %v264 = vld [vmem:[#allocation7 + $0x20] sm:$0xf]
    %v265 = vld [vmem:[#allocation7 + $0x24] sm:$0xf]
    %v266 = vld [vmem:[#allocation7 + $0x28] sm:$0xf]
    %v267 = vld [vmem:[#allocation7 + $0x2c] sm:$0xf]
    %v268 = vld [vmem:[#allocation7 + $0x30] sm:$0xf]
    %v269 = vld [vmem:[#allocation7 + $0x34] sm:$0xf]
    %v270 = vld [vmem:[#allocation7 + $0x38] sm:$0xf]
    %v271 = vld [vmem:[#allocation7 + $0x3c] sm:$0xf]
    %v272 = vld [vmem:[%s4] sm:$0x1]
    %v273 = vpack.c.bf16 %v255, %v255
    %v275 = vlaneseq
    %v276 = vshrl.u32 %v275, 7
    %v277 = vsub.s32 0, %v276
    %v278 = vrot.slane %v272, %v277
    %v296 = vunpack.c.l.b16 %v256
    %v297 = vunpack.c.l.b16 %v257
    %v298 = vunpack.c.l.b16 %v258
    %v299 = vunpack.c.l.b16 %v259
    %v300 = vunpack.c.l.b16 %v260
    %v301 = vunpack.c.l.b16 %v261
    %v302 = vunpack.c.l.b16 %v262
    %v303 = vunpack.c.l.b16 %v263
    %v304 = vunpack.c.l.b16 %v264
    %v305 = vunpack.c.l.b16 %v265
    %v306 = vunpack.c.l.b16 %v266
    %v307 = vunpack.c.l.b16 %v267
    %v308 = vunpack.c.l.b16 %v268
    %v309 = vunpack.c.l.b16 %v269
    %v310 = vunpack.c.l.b16 %v270
    %v311 = vunpack.c.l.b16 %v271
    %v312 = vpack.c.b16 %v297, %v296
    %v313 = vpack.c.b16 %v299, %v298
    %v314 = vpack.c.b16 %v301, %v300
    %v315 = vpack.c.b16 %v303, %v302
    %v316 = vpack.c.b16 %v305, %v304
    %v317 = vpack.c.b16 %v307, %v306
    %v318 = vpack.c.b16 %v309, %v308
    %v319 = vpack.c.b16 %v311, %v310
    %328 = vmatprep.subr.bf16.mxu0 0
    %329 = vmatpush1.bf16.msra.mxu0 %v319
    %330 = vmatprep.subr.bf16.mxu0 0
    %331 = vmatpush1.bf16.msra.mxu0 %v318
    %332 = vmatprep.subr.bf16.mxu0 0
    %333 = vmatpush1.bf16.msra.mxu0 %v317
    %334 = vmatprep.subr.bf16.mxu0 0
    %335 = vmatpush1.bf16.msra.mxu0 %v316
    %336 = vmatprep.subr.bf16.mxu0 0
    %337 = vmatpush1.bf16.msra.mxu0 %v315
    %338 = vmatprep.subr.bf16.mxu0 0
    %339 = vmatpush1.bf16.msra.mxu0 %v314
    %340 = vmatprep.subr.bf16.mxu0 0
    %341 = vmatpush1.bf16.msra.mxu0 %v313
    %342 = vmatprep.subr.bf16.mxu0 0
    %343 = vmatpush1.bf16.msra.mxu0 %v312
    %344 = vmatprep.subr.bf16.mxu0 0
    %345 = vmatpush2.bf16.msra.mxu0 0
    %346 = vmatprep.subr.bf16.mxu0 0
    %347 = vmatpush2.bf16.msra.mxu0 0
    %348 = vmatprep.subr.bf16.mxu0 0
    %349 = vmatpush2.bf16.msra.mxu0 0
    %350 = vmatprep.subr.bf16.mxu0 0
    %351 = vmatpush2.bf16.msra.mxu0 0
    %352 = vmatprep.subr.bf16.mxu0 0
    %353 = vmatpush2.bf16.msra.mxu0 0
    %354 = vmatprep.subr.bf16.mxu0 0
    %355 = vmatpush2.bf16.msra.mxu0 0
    %356 = vmatprep.subr.bf16.mxu0 0
    %357 = vmatpush2.bf16.msra.mxu0 0
    %358 = vmatprep.subr.bf16.mxu0 0
    %359 = vmatpush2.bf16.msra.mxu0 0
    %360 = vmatprep.mubr.bf16.mxu0 0
    %361 = vmatmul.mubr.bf16.gmra.mxu0 %v273
    %v362 = vpop.f32.mrf.mxu0
    %v363 = vadd.f32 %v278, %v362
    %v364 = vpop.f32.mrf.mxu0
    %v365 = vpop.f32.mrf.mxu0
    %v366 = vpop.f32.mrf.mxu0
    %367 = vdwg.mxu0
    %v368 = vtanh.pop %v363
    %v369 = vld [vmem:[#allocation8] sm:$0xf]
    %v370 = vld [vmem:[#allocation8 + $0x4] sm:$0xf]
    %v371 = vld [vmem:[#allocation8 + $0x8] sm:$0xf]
    %v372 = vld [vmem:[#allocation8 + $0xc] sm:$0xf]
    %v373 = vld [vmem:[#allocation8 + $0x10] sm:$0xf]
    %v374 = vld [vmem:[#allocation8 + $0x14] sm:$0xf]
    %v375 = vld [vmem:[#allocation8 + $0x18] sm:$0xf]
    %v376 = vld [vmem:[#allocation8 + $0x1c] sm:$0xf]
    %v377 = vld [vmem:[#allocation8 + $0x20] sm:$0xf]
    %v378 = vld [vmem:[#allocation8 + $0x24] sm:$0xf]
    %v379 = vld [vmem:[#allocation8 + $0x28] sm:$0xf]
    %v380 = vld [vmem:[#allocation8 + $0x2c] sm:$0xf]
    %v381 = vld [vmem:[#allocation8 + $0x30] sm:$0xf]
    %v382 = vld [vmem:[#allocation8 + $0x34] sm:$0xf]
    %v383 = vld [vmem:[#allocation8 + $0x38] sm:$0xf]
    %v384 = vld [vmem:[#allocation8 + $0x3c] sm:$0xf]
    %v385 = vld [vmem:[%s6] sm:$0x1]
    %v386 = vpack.c.bf16 %v368, %v368
    %v388 = vlaneseq
    %v389 = vshrl.u32 %v388, 7
    %v390 = vsub.s32 0, %v389
    %v391 = vrot.slane %v385, %v390
    %v409 = vunpack.c.l.b16 %v369
    %v410 = vunpack.c.l.b16 %v370
    %v411 = vunpack.c.l.b16 %v371
    %v412 = vunpack.c.l.b16 %v372
    %v413 = vunpack.c.l.b16 %v373
    %v414 = vunpack.c.l.b16 %v374
    %v415 = vunpack.c.l.b16 %v375
    %v416 = vunpack.c.l.b16 %v376
    %v417 = vunpack.c.l.b16 %v377
    %v418 = vunpack.c.l.b16 %v378
    %v419 = vunpack.c.l.b16 %v379
    %v420 = vunpack.c.l.b16 %v380
    %v421 = vunpack.c.l.b16 %v381
    %v422 = vunpack.c.l.b16 %v382
    %v423 = vunpack.c.l.b16 %v383
    %v424 = vunpack.c.l.b16 %v384
    %v425 = vpack.c.b16 %v410, %v409
    %v426 = vpack.c.b16 %v412, %v411
    %v427 = vpack.c.b16 %v414, %v413
    %v428 = vpack.c.b16 %v416, %v415
    %v429 = vpack.c.b16 %v418, %v417
    %v430 = vpack.c.b16 %v420, %v419
    %v431 = vpack.c.b16 %v422, %v421
    %v432 = vpack.c.b16 %v424, %v423
    %441 = vmatprep.subr.bf16.mxu0 0
    %442 = vmatpush1.bf16.msra.mxu0 %v432
    %443 = vmatprep.subr.bf16.mxu0 0
    %444 = vmatpush1.bf16.msra.mxu0 %v431
    %445 = vmatprep.subr.bf16.mxu0 0
    %446 = vmatpush1.bf16.msra.mxu0 %v430
    %447 = vmatprep.subr.bf16.mxu0 0
    %448 = vmatpush1.bf16.msra.mxu0 %v429
    %449 = vmatprep.subr.bf16.mxu0 0
    %450 = vmatpush1.bf16.msra.mxu0 %v428
    %451 = vmatprep.subr.bf16.mxu0 0
    %452 = vmatpush1.bf16.msra.mxu0 %v427
    %453 = vmatprep.subr.bf16.mxu0 0
    %454 = vmatpush1.bf16.msra.mxu0 %v426
    %455 = vmatprep.subr.bf16.mxu0 0
    %456 = vmatpush1.bf16.msra.mxu0 %v425
    %457 = vmatprep.subr.bf16.mxu0 0
    %458 = vmatpush2.bf16.msra.mxu0 0
    %459 = vmatprep.subr.bf16.mxu0 0
    %460 = vmatpush2.bf16.msra.mxu0 0
    %461 = vmatprep.subr.bf16.mxu0 0
    %462 = vmatpush2.bf16.msra.mxu0 0
    %463 = vmatprep.subr.bf16.mxu0 0
    %464 = vmatpush2.bf16.msra.mxu0 0
    %465 = vmatprep.subr.bf16.mxu0 0
    %466 = vmatpush2.bf16.msra.mxu0 0
    %467 = vmatprep.subr.bf16.mxu0 0
    %468 = vmatpush2.bf16.msra.mxu0 0
    %469 = vmatprep.subr.bf16.mxu0 0
    %470 = vmatpush2.bf16.msra.mxu0 0
    %471 = vmatprep.subr.bf16.mxu0 0
    %472 = vmatpush2.bf16.msra.mxu0 0
    %473 = vmatprep.mubr.bf16.mxu0 0
    %474 = vmatmul.mubr.bf16.gmra.mxu0 %v386
    %v475 = vpop.f32.mrf.mxu0
    %v476 = vadd.f32 %v391, %v475
    %v477 = vpop.f32.mrf.mxu0
    %v478 = vpop.f32.mrf.mxu0
    %v479 = vpop.f32.mrf.mxu0
    %480 = vdwg.mxu0
    %481 = vst [vmem:[#allocation15] sm:$0xff] %v476
    %v482 = vld [vmem:[#allocation10] sm:$0xf]
    %v483 = vld [vmem:[#allocation10 + $0x4] sm:$0xf]
    %v484 = vld [vmem:[#allocation10 + $0x8] sm:$0xf]
    %v485 = vld [vmem:[#allocation10 + $0xc] sm:$0xf]
    %v486 = vld [vmem:[#allocation10 + $0x10] sm:$0xf]
    %v487 = vld [vmem:[#allocation10 + $0x14] sm:$0xf]
    %v488 = vld [vmem:[#allocation10 + $0x18] sm:$0xf]
    %v489 = vld [vmem:[#allocation10 + $0x1c] sm:$0xf]
    %v490 = vld [vmem:[#allocation10 + $0x20] sm:$0xf]
    %v491 = vld [vmem:[#allocation10 + $0x24] sm:$0xf]
    %v492 = vld [vmem:[#allocation10 + $0x28] sm:$0xf]
    %v493 = vld [vmem:[#allocation10 + $0x2c] sm:$0xf]
    %v494 = vld [vmem:[#allocation10 + $0x30] sm:$0xf]
    %v495 = vld [vmem:[#allocation10 + $0x34] sm:$0xf]
    %v496 = vld [vmem:[#allocation10 + $0x38] sm:$0xf]
    %v497 = vld [vmem:[#allocation10 + $0x3c] sm:$0xf]
    %v498 = vld [vmem:[%s8] sm:$0x1]
    %v499 = vpack.c.bf16 %v476, %v476
    %v501 = vlaneseq
    %v502 = vshrl.u32 %v501, 7
    %v503 = vsub.s32 0, %v502
    %v504 = vrot.slane %v498, %v503
    %v522 = vunpack.c.l.b16 %v482
    %v523 = vunpack.c.l.b16 %v483
    %v524 = vunpack.c.l.b16 %v484
    %v525 = vunpack.c.l.b16 %v485
    %v526 = vunpack.c.l.b16 %v486
    %v527 = vunpack.c.l.b16 %v487
    %v528 = vunpack.c.l.b16 %v488
    %v529 = vunpack.c.l.b16 %v489
    %v530 = vunpack.c.l.b16 %v490
    %v531 = vunpack.c.l.b16 %v491
    %v532 = vunpack.c.l.b16 %v492
    %v533 = vunpack.c.l.b16 %v493
    %v534 = vunpack.c.l.b16 %v494
    %v535 = vunpack.c.l.b16 %v495
    %v536 = vunpack.c.l.b16 %v496
    %v537 = vunpack.c.l.b16 %v497
    %v538 = vpack.c.b16 %v523, %v522
    %v539 = vpack.c.b16 %v525, %v524
    %v540 = vpack.c.b16 %v527, %v526
    %v541 = vpack.c.b16 %v529, %v528
    %v542 = vpack.c.b16 %v531, %v530
    %v543 = vpack.c.b16 %v533, %v532
    %v544 = vpack.c.b16 %v535, %v534
    %v545 = vpack.c.b16 %v537, %v536
    %554 = vmatprep.subr.bf16.mxu0 0
    %555 = vmatpush1.bf16.msra.mxu0 %v545
    %556 = vmatprep.subr.bf16.mxu0 0
    %557 = vmatpush1.bf16.msra.mxu0 %v544
    %558 = vmatprep.subr.bf16.mxu0 0
    %559 = vmatpush1.bf16.msra.mxu0 %v543
    %560 = vmatprep.subr.bf16.mxu0 0
    %561 = vmatpush1.bf16.msra.mxu0 %v542
    %562 = vmatprep.subr.bf16.mxu0 0
    %563 = vmatpush1.bf16.msra.mxu0 %v541
    %564 = vmatprep.subr.bf16.mxu0 0
    %565 = vmatpush1.bf16.msra.mxu0 %v540
    %566 = vmatprep.subr.bf16.mxu0 0
    %567 = vmatpush1.bf16.msra.mxu0 %v539
    %568 = vmatprep.subr.bf16.mxu0 0
    %569 = vmatpush1.bf16.msra.mxu0 %v538
    %570 = vmatprep.subr.bf16.mxu0 0
    %571 = vmatpush2.bf16.msra.mxu0 0
    %572 = vmatprep.subr.bf16.mxu0 0
    %573 = vmatpush2.bf16.msra.mxu0 0
    %574 = vmatprep.subr.bf16.mxu0 0
    %575 = vmatpush2.bf16.msra.mxu0 0
    %576 = vmatprep.subr.bf16.mxu0 0
    %577 = vmatpush2.bf16.msra.mxu0 0
    %578 = vmatprep.subr.bf16.mxu0 0
    %579 = vmatpush2.bf16.msra.mxu0 0
    %580 = vmatprep.subr.bf16.mxu0 0
    %581 = vmatpush2.bf16.msra.mxu0 0
    %582 = vmatprep.subr.bf16.mxu0 0
    %583 = vmatpush2.bf16.msra.mxu0 0
    %584 = vmatprep.subr.bf16.mxu0 0
    %585 = vmatpush2.bf16.msra.mxu0 0
    %586 = vmatprep.mubr.bf16.mxu0 0
    %587 = vmatmul.mubr.bf16.gmra.mxu0 %v499
    %v588 = vpop.f32.mrf.mxu0
    %v589 = vadd.f32 %v504, %v588
    %v590 = vpop.f32.mrf.mxu0
    %v591 = vpop.f32.mrf.mxu0
    %v592 = vpop.f32.mrf.mxu0
    %593 = vdwg.mxu0
    %v594 = vtanh.pop %v589
    %v595 = vld [vmem:[#allocation11] sm:$0xf]
    %v596 = vld [vmem:[#allocation11 + $0x4] sm:$0xf]
    %v597 = vld [vmem:[#allocation11 + $0x8] sm:$0xf]
    %v598 = vld [vmem:[#allocation11 + $0xc] sm:$0xf]
    %v599 = vld [vmem:[#allocation11 + $0x10] sm:$0xf]
    %v600 = vld [vmem:[#allocation11 + $0x14] sm:$0xf]
    %v601 = vld [vmem:[#allocation11 + $0x18] sm:$0xf]
    %v602 = vld [vmem:[#allocation11 + $0x1c] sm:$0xf]
    %v603 = vld [vmem:[#allocation11 + $0x20] sm:$0xf]
    %v604 = vld [vmem:[#allocation11 + $0x24] sm:$0xf]
    %v605 = vld [vmem:[#allocation11 + $0x28] sm:$0xf]
    %v606 = vld [vmem:[#allocation11 + $0x2c] sm:$0xf]
    %v607 = vld [vmem:[#allocation11 + $0x30] sm:$0xf]
    %v608 = vld [vmem:[#allocation11 + $0x34] sm:$0xf]
    %v609 = vld [vmem:[#allocation11 + $0x38] sm:$0xf]
    %v610 = vld [vmem:[#allocation11 + $0x3c] sm:$0xf]
    %v611 = vld [vmem:[%s10] sm:$0x1]
    %v612 = vpack.c.bf16 %v594, %v594
    %v614 = vlaneseq
    %v615 = vshrl.u32 %v614, 7
    %v616 = vsub.s32 0, %v615
    %v617 = vrot.slane %v611, %v616
    %v635 = vunpack.c.l.b16 %v595
    %v636 = vunpack.c.l.b16 %v596
    %v637 = vunpack.c.l.b16 %v597
    %v638 = vunpack.c.l.b16 %v598
    %v639 = vunpack.c.l.b16 %v599
    %v640 = vunpack.c.l.b16 %v600
    %v641 = vunpack.c.l.b16 %v601
    %v642 = vunpack.c.l.b16 %v602
    %v643 = vunpack.c.l.b16 %v603
    %v644 = vunpack.c.l.b16 %v604
    %v645 = vunpack.c.l.b16 %v605
    %v646 = vunpack.c.l.b16 %v606
    %v647 = vunpack.c.l.b16 %v607
    %v648 = vunpack.c.l.b16 %v608
    %v649 = vunpack.c.l.b16 %v609
    %v650 = vunpack.c.l.b16 %v610
    %v651 = vpack.c.b16 %v636, %v635
    %v652 = vpack.c.b16 %v638, %v637
    %v653 = vpack.c.b16 %v640, %v639
    %v654 = vpack.c.b16 %v642, %v641
    %v655 = vpack.c.b16 %v644, %v643
    %v656 = vpack.c.b16 %v646, %v645
    %v657 = vpack.c.b16 %v648, %v647
    %v658 = vpack.c.b16 %v650, %v649
    %667 = vmatprep.subr.bf16.mxu0 0
    %668 = vmatpush1.bf16.msra.mxu0 %v658
    %669 = vmatprep.subr.bf16.mxu0 0
    %670 = vmatpush1.bf16.msra.mxu0 %v657
    %671 = vmatprep.subr.bf16.mxu0 0
    %672 = vmatpush1.bf16.msra.mxu0 %v656
    %673 = vmatprep.subr.bf16.mxu0 0
    %674 = vmatpush1.bf16.msra.mxu0 %v655
    %675 = vmatprep.subr.bf16.mxu0 0
    %676 = vmatpush1.bf16.msra.mxu0 %v654
    %677 = vmatprep.subr.bf16.mxu0 0
    %678 = vmatpush1.bf16.msra.mxu0 %v653
    %679 = vmatprep.subr.bf16.mxu0 0
    %680 = vmatpush1.bf16.msra.mxu0 %v652
    %681 = vmatprep.subr.bf16.mxu0 0
    %682 = vmatpush1.bf16.msra.mxu0 %v651
    %683 = vmatprep.subr.bf16.mxu0 0
    %684 = vmatpush2.bf16.msra.mxu0 0
    %685 = vmatprep.subr.bf16.mxu0 0
    %686 = vmatpush2.bf16.msra.mxu0 0
    %687 = vmatprep.subr.bf16.mxu0 0
    %688 = vmatpush2.bf16.msra.mxu0 0
    %689 = vmatprep.subr.bf16.mxu0 0
    %690 = vmatpush2.bf16.msra.mxu0 0
    %691 = vmatprep.subr.bf16.mxu0 0
    %692 = vmatpush2.bf16.msra.mxu0 0
    %693 = vmatprep.subr.bf16.mxu0 0
    %694 = vmatpush2.bf16.msra.mxu0 0
    %695 = vmatprep.subr.bf16.mxu0 0
    %696 = vmatpush2.bf16.msra.mxu0 0
    %697 = vmatprep.subr.bf16.mxu0 0
    %698 = vmatpush2.bf16.msra.mxu0 0
    %699 = vmatprep.mubr.bf16.mxu0 0
    %700 = vmatmul.mubr.bf16.gmra.mxu0 %v612
    %v701 = vpop.f32.mrf.mxu0
    %v702 = vadd.f32 %v617, %v701
    %v703 = vpop.f32.mrf.mxu0
    %v704 = vpop.f32.mrf.mxu0
    %v705 = vpop.f32.mrf.mxu0
    %706 = vdwg.mxu0
    %v707 = vtanh.pop %v702
    %v708 = vld [vmem:[#allocation13] sm:$0xf]
    %v709 = vld [vmem:[#allocation13 + $0x4] sm:$0xf]
    %v710 = vld [vmem:[#allocation13 + $0x8] sm:$0xf]
    %v711 = vld [vmem:[#allocation13 + $0xc] sm:$0xf]
    %v712 = vld [vmem:[#allocation13 + $0x10] sm:$0xf]
    %v713 = vld [vmem:[#allocation13 + $0x14] sm:$0xf]
    %v714 = vld [vmem:[#allocation13 + $0x18] sm:$0xf]
    %v715 = vld [vmem:[#allocation13 + $0x1c] sm:$0xf]
    %v716 = vld [vmem:[#allocation13 + $0x20] sm:$0xf]
    %v717 = vld [vmem:[#allocation13 + $0x24] sm:$0xf]
    %v718 = vld [vmem:[#allocation13 + $0x28] sm:$0xf]
    %v719 = vld [vmem:[#allocation13 + $0x2c] sm:$0xf]
    %v720 = vld [vmem:[#allocation13 + $0x30] sm:$0xf]
    %v721 = vld [vmem:[#allocation13 + $0x34] sm:$0xf]
    %v722 = vld [vmem:[#allocation13 + $0x38] sm:$0xf]
    %v723 = vld [vmem:[#allocation13 + $0x3c] sm:$0xf]
    %v724 = vld [vmem:[%s12] sm:$0x1]
    %v725 = vpack.c.bf16 %v707, %v707
    %v727 = vlaneseq
    %v728 = vshrl.u32 %v727, 7
    %v729 = vsub.s32 0, %v728
    %v730 = vrot.slane %v724, %v729
    %v748 = vunpack.c.l.b16 %v708
    %v749 = vunpack.c.l.b16 %v709
    %v750 = vunpack.c.l.b16 %v710
    %v751 = vunpack.c.l.b16 %v711
    %v752 = vunpack.c.l.b16 %v712
    %v753 = vunpack.c.l.b16 %v713
    %v754 = vunpack.c.l.b16 %v714
    %v755 = vunpack.c.l.b16 %v715
    %v756 = vunpack.c.l.b16 %v716
    %v757 = vunpack.c.l.b16 %v717
    %v758 = vunpack.c.l.b16 %v718
    %v759 = vunpack.c.l.b16 %v719
    %v760 = vunpack.c.l.b16 %v720
    %v761 = vunpack.c.l.b16 %v721
    %v762 = vunpack.c.l.b16 %v722
    %v763 = vunpack.c.l.b16 %v723
    %v764 = vpack.c.b16 %v749, %v748
    %v765 = vpack.c.b16 %v751, %v750
    %v766 = vpack.c.b16 %v753, %v752
    %v767 = vpack.c.b16 %v755, %v754
    %v768 = vpack.c.b16 %v757, %v756
    %v769 = vpack.c.b16 %v759, %v758
    %v770 = vpack.c.b16 %v761, %v760
    %v771 = vpack.c.b16 %v763, %v762
    %780 = vmatprep.subr.bf16.mxu0 0
    %781 = vmatpush1.bf16.msra.mxu0 %v771
    %782 = vmatprep.subr.bf16.mxu0 0
    %783 = vmatpush1.bf16.msra.mxu0 %v770
    %784 = vmatprep.subr.bf16.mxu0 0
    %785 = vmatpush1.bf16.msra.mxu0 %v769
    %786 = vmatprep.subr.bf16.mxu0 0
    %787 = vmatpush1.bf16.msra.mxu0 %v768
    %788 = vmatprep.subr.bf16.mxu0 0
    %789 = vmatpush1.bf16.msra.mxu0 %v767
    %790 = vmatprep.subr.bf16.mxu0 0
    %791 = vmatpush1.bf16.msra.mxu0 %v766
    %792 = vmatprep.subr.bf16.mxu0 0
    %793 = vmatpush1.bf16.msra.mxu0 %v765
    %794 = vmatprep.subr.bf16.mxu0 0
    %795 = vmatpush1.bf16.msra.mxu0 %v764
    %796 = vmatprep.subr.bf16.mxu0 0
    %797 = vmatpush2.bf16.msra.mxu0 0
    %798 = vmatprep.subr.bf16.mxu0 0
    %799 = vmatpush2.bf16.msra.mxu0 0
    %800 = vmatprep.subr.bf16.mxu0 0
    %801 = vmatpush2.bf16.msra.mxu0 0
    %802 = vmatprep.subr.bf16.mxu0 0
    %803 = vmatpush2.bf16.msra.mxu0 0
    %804 = vmatprep.subr.bf16.mxu0 0
    %805 = vmatpush2.bf16.msra.mxu0 0
    %806 = vmatprep.subr.bf16.mxu0 0
    %807 = vmatpush2.bf16.msra.mxu0 0
    %808 = vmatprep.subr.bf16.mxu0 0
    %809 = vmatpush2.bf16.msra.mxu0 0
    %810 = vmatprep.subr.bf16.mxu0 0
    %811 = vmatpush2.bf16.msra.mxu0 0
    %812 = vmatprep.mubr.bf16.mxu0 0
    %813 = vmatmul.mubr.bf16.gmra.mxu0 %v725
    %v814 = vpop.f32.mrf.mxu0
    %v815 = vadd.f32 %v730, %v814
    %v816 = vpop.f32.mrf.mxu0
    %v817 = vpop.f32.mrf.mxu0
    %v818 = vpop.f32.mrf.mxu0
    %819 = vdwg.mxu0
    %820 = vst [vmem:[#allocation14] sm:$0xff] %v815
    // Predicated region
    $region82: #{tpu_custom_call.1} parent=1 // pred_check
      _
    $region83: #{tpu_custom_call.1} parent=1 // pred_check_branch
      %822 = sbr.rel (0) target = $region85
    $region84: #{tpu_custom_call.1} parent=1 // pred_region
      %s824 = ssub.s32 128, 128
      %825 = vsyncadd [#allocation4], %s824
      %s827 = sshll.u32 [#allocation14], 4
      %s828 = int_to_ptr.vmem [resolvable:$true] %s827
      %830 = dma.vmem_to_hbm [thread:$0]  %s828, 128, %s13, [#allocation4]
    $region85: #{tpu_custom_call.1} parent=1 // pred_fallthru
      _
    // Predicated region
    $region86: #{tpu_custom_call.1} parent=1 // pred_check
      _
    $region87: #{tpu_custom_call.1} parent=1 // pred_check_branch
      %832 = sbr.rel (0) target = $region89
    $region88: #{tpu_custom_call.1} parent=1 // pred_region
      %s834 = ssub.s32 128, 128
      %835 = vsyncadd [#allocation16], %s834
      %s837 = sshll.u32 [#allocation15], 4
      %s838 = int_to_ptr.vmem [resolvable:$true] %s837
      %840 = dma.vmem_to_hbm [thread:$0]  %s838, 128, %s14, [#allocation16]
    $region89: #{tpu_custom_call.1} parent=1 // pred_fallthru
      _
    // Predicated region
    $region90: #{tpu_custom_call.1} parent=1 // pred_check
      _
    $region91: #{tpu_custom_call.1} parent=1 // pred_check_branch
      %842 = sbr.rel (0) target = $region93
    $region92: #{tpu_custom_call.1} parent=1 // pred_region
      %843 = dma.done [#allocation4], 128
    $region93: #{tpu_custom_call.1} parent=1 // pred_fallthru
      _
    // Predicated region
    $region94: #{tpu_custom_call.1} parent=1 // pred_check
      _
    $region95: #{tpu_custom_call.1} parent=1 // pred_check_branch
      %845 = sbr.rel (0) target = $region97
    $region96: #{tpu_custom_call.1} parent=1 // pred_region
      %846 = dma.done [#allocation16], 128
    $region97: #{tpu_custom_call.1} parent=1 // pred_fallthru
      _
    %847 = vsyncpa [#allocation3], 1
    %848 = vsyncpa [#allocation6], 1
    %849 = vsyncpa [#allocation9], 1
    %850 = vsyncpa [#allocation12], 1
    %851 = vsyncpa [#allocation4], 1
    %852 = vsyncpa [#allocation16], 1

</llo_original>
